<compile_context>
chip_gen: v7x
topology: tpu7x:2x2x1
jax: 0.10.0
libtpu: 0.0.40
codegen_flags: <defaults>
</compile_context>

<pallas_src>
import math
import numpy as np
import jax
import jax.numpy as jnp
from jax.experimental import pallas as pl
from jax.experimental.pallas import tpu as pltpu

INPUT_SHAPE = (4, 4, 4, 4)    # prod = 256 input features
OUTPUT_SHAPE = (4, 4, 4, 4)   # prod = 256 output features
RANK = 8


def _cdiv(a, b):
    return -(-a // b)


def _round_up(a, b):
    return _cdiv(a, b) * b


def _xavier_normal(key, shape, in_axes, out_axes):
    fan_in = int(np.prod([shape[a] for a in in_axes]))
    fan_out = int(np.prod([shape[a] for a in out_axes]))
    std = math.sqrt(2.0 / (fan_in + fan_out))
    return std * jax.random.normal(key, shape, dtype=jnp.float32)


def init_ht_params(key, input_shape, output_shape, rank):
    """Deterministic synthetic init mirroring HT.__init__ parameter shapes."""
    ks = jax.random.split(key, 8)
    F = [
        _xavier_normal(ks[k], (input_shape[k], output_shape[k], rank), [0], [1, 2])
        for k in range(4)
    ]
    CL = _xavier_normal(ks[4], (rank, rank, rank), [0], [1, 2])   # left-child core
    CR = _xavier_normal(ks[5], (rank, rank, rank), [0, 2], [1])   # right-child core
    fan_in = int(np.prod(input_shape))
    bound = 1.0 / math.sqrt(fan_in)
    bias = jax.random.uniform(
        ks[6], (int(np.prod(output_shape)),), minval=-bound, maxval=bound,
        dtype=jnp.float32)
    return F, CL, CR, bias


def fold_ht_params(params, input_shape, output_shape, rank):
    """Batch-independent parameter folding.  Call ONCE at parameter-load time
    (hoisted out of forward so it is never re-traced / re-executed per call)."""
    F, CL, CR, bias = params
    i0, i1, i2, i3 = input_shape
    o0, o1, o2, o3 = output_shape
    N01, N23 = i0 * i1, i2 * i3
    P01, P23 = o0 * o1, o2 * o3
    I, O = N01 * N23, P01 * P23
    # left / right HT sub-tree folds
    WL = jnp.einsum('iua,jvb,abc->ijuvc', F[0], F[1], CL).reshape(N01, P01, rank)
    WR = jnp.einsum('kwd,lxe,dec->klwxc', F[2], F[3], CR).reshape(N23, P23, rank)
    # dense fold over the shared root rank c:
    #   W[(n01 n23), (p01 p23)] = sum_c WL[n01,p01,c] * WR[n23,p23,c]
    W = jnp.einsum('muc,nvc->mnuv', WL, WR).reshape(I, O)
    return W.astype(jnp.bfloat16), bias.reshape(1, O).astype(jnp.float32)


def _ht_kernel(x_ref, w_ref, b_ref, o_ref):
    # x_ref: (TB, I) f32 | w_ref: (I, O) bf16 | b_ref: (1, O) f32 | o_ref: (TB, O)
    x_bf = x_ref[...].astype(jnp.bfloat16)          # VPU cast — free slot
    acc = jnp.dot(x_bf, w_ref[...], preferred_element_type=jnp.float32)
    o_ref[...] = (acc + b_ref[...]).astype(o_ref.dtype)


def ht_forward(x, folded, *, out_dtype=jnp.float32):
    """x: (B, I) f32 -> (B, O) out_dtype.  `folded` = fold_ht_params(...)."""
    W, bias_row = folded
    I, O = W.shape
    B = x.shape[0]
    assert x.shape[1] == I

    # --- batch tiling --------------------------------------------------------
    if B <= 128:
        # Single grid step, no padding: block_shape == full array dims is
        # exempt from the (8,128) divisibility rule.
        TB, Bp, grid_n = B, B, 1
    else:
        B8 = _round_up(B, 8)
        # >=2 steps so v7x's second TensorCore shards the "parallel" axis;
        # cap tiles near 512 rows (best measured HBM-roofline fraction) while
        # keeping padding to < 8 rows per step.
        grid_n = max(2, _cdiv(B8, 512))
        TB = _round_up(_cdiv(B8, grid_n), 8)
        Bp = grid_n * TB

    xp = x if Bp == B else jnp.pad(x, ((0, Bp - B), (0, 0)))

    out = pl.pallas_call(
        _ht_kernel,
        out_shape=jax.ShapeDtypeStruct((Bp, O), out_dtype),
        grid=(grid_n,),
        in_specs=[
            pl.BlockSpec((TB, I), lambda i: (i, 0)),   # f32 activations, lane-dense
            pl.BlockSpec((I, O), lambda i: (0, 0)),    # folded bf16 weight, resident
            pl.BlockSpec((1, O), lambda i: (0, 0)),    # f32 bias row, resident
        ],
        out_specs=pl.BlockSpec((TB, O), lambda i: (i, 0)),
        compiler_params=pltpu.CompilerParams(
            dimension_semantics=("parallel",)),
    )(xp, W, bias_row)

    return out if Bp == B else out[:B]


if __name__ == "__main__":
    key = jax.random.PRNGKey(0)
    pkey, xkey, xkey2 = jax.random.split(key, 3)
    params = init_ht_params(pkey, INPUT_SHAPE, OUTPUT_SHAPE, RANK)
    folded = fold_ht_params(params, INPUT_SHAPE, OUTPUT_SHAPE, RANK)

    I = int(np.prod(INPUT_SHAPE))
    O = int(np.prod(OUTPUT_SHAPE))
    F, CL, CR, bias = params

    def reference(xr):
        # pure-JAX f32 reference: full HT tensor-network contraction (same
        # semantics as HT.forward, up to fp reordering).
        x5 = xr.reshape((xr.shape[0],) + INPUT_SHAPE)
        return jnp.einsum('zijkl,iua,jvb,abc,kwd,lxe,dec->zuvwx',
                          x5, F[0], F[1], CL, F[2], F[3], CR
                          ).reshape(xr.shape[0], O) + bias

    # Small batch: single un-padded grid step.
    B = 8
    x = jax.random.normal(xkey, (B, I), dtype=jnp.float32)
    out = jax.block_until_ready(ht_forward(x, folded))
    # Tolerance covers bf16 rounding of x (in-kernel cast) and W (fold);
    # accumulation and bias add stay f32.
    np.testing.assert_allclose(np.asarray(out), np.asarray(reference(x)),
                               rtol=1e-2, atol=1e-2)

    # Ragged larger batch: exercises the >=2-step tiled path + tail padding.
    B2 = 300
    x2 = jax.random.normal(xkey2, (B2, I), dtype=jnp.float32)
    out2 = jax.block_until_ready(ht_forward(x2, folded))
    np.testing.assert_allclose(np.asarray(out2), np.asarray(reference(x2)),
                               rtol=1e-2, atol=1e-2)

    print("KERNEL_OK")
</pallas_src>

<mosaic_0001>
module attributes {stable_mosaic.version = 11 : i64} {
  func.func @_ht_kernel(%arg0: i32, %arg1: memref<8x256xf32, #tpu.memory_space<vmem>>, %arg2: memref<256x256xbf16, #tpu.memory_space<vmem>>, %arg3: memref<1x256xf32, #tpu.memory_space<vmem>>, %arg4: memref<8x256xf32, #tpu.memory_space<vmem>>) attributes {dimension_semantics = [#tpu.dimension_semantics<parallel>], iteration_bounds = array<i64: 1>, scalar_prefetch = 0 : i64, scratch_operands = 0 : i64, tpu.core_type = #tpu.core_type<tc>, window_params = [{transform_indices = @transform_0, window_bounds = array<i64: 8, 256>}, {pipeline_mode = #tpu.pipeline_mode<synchronous>, transform_indices = @transform_1, window_bounds = array<i64: 256, 256>}, {pipeline_mode = #tpu.pipeline_mode<synchronous>, transform_indices = @transform_2, window_bounds = array<i64: 1, 256>}, {transform_indices = @transform_3, window_bounds = array<i64: 8, 256>}]} {
    %c0 = arith.constant 0 : index
    %c0_0 = arith.constant 0 : index
    %0 = vector.load %arg1[%c0, %c0_0] : memref<8x256xf32, #tpu.memory_space<vmem>>, vector<8x256xf32>
    %1 = arith.truncf %0 : vector<8x256xf32> to vector<8x256xbf16>
    %c0_1 = arith.constant 0 : index
    %c0_2 = arith.constant 0 : index
    %2 = vector.load %arg2[%c0_1, %c0_2] : memref<256x256xbf16, #tpu.memory_space<vmem>>, vector<256x256xbf16>
    %cst = arith.constant dense<0.000000e+00> : vector<8x256xf32>
    %3 = tpu.matmul %1, %2, %cst {dimension_numbers = #tpu.dot_dimension_numbers<[1], [0], [0], [1], [0, 0, 1, 1], [], []>} : vector<8x256xbf16>, vector<256x256xbf16>, vector<8x256xf32> -> vector<8x256xf32>
    %c0_3 = arith.constant 0 : index
    %c0_4 = arith.constant 0 : index
    %4 = vector.load %arg3[%c0_3, %c0_4] : memref<1x256xf32, #tpu.memory_space<vmem>>, vector<1x256xf32>
    %5 = vector.broadcast %4 : vector<1x256xf32> to vector<8x256xf32>
    %6 = arith.addf %3, %5 : vector<8x256xf32>
    %c0_5 = arith.constant 0 : index
    %c0_6 = arith.constant 0 : index
    %7 = vector.load %arg4[%c0_5, %c0_6] : memref<8x256xf32, #tpu.memory_space<vmem>>, vector<8x256xf32>
    tpu.vector_store %arg4[%c0_5, %c0_6], %6 {strides = array<i32>} : memref<8x256xf32, #tpu.memory_space<vmem>>, vector<8x256xf32>,
    return
  }
  func.func @transform_0(%arg0: i32) -> (i32, i32) {
    %c0_i32 = arith.constant 0 : i32
    %c0_i32_0 = arith.constant 0 : i32
    return %arg0, %c0_i32 : i32, i32
  }
  func.func @transform_1(%arg0: i32) -> (i32, i32) {
    %c0_i32 = arith.constant 0 : i32
    %c0_i32_0 = arith.constant 0 : i32
    %c0_i32_1 = arith.constant 0 : i32
    return %c0_i32, %c0_i32_0 : i32, i32
  }
  func.func @transform_2(%arg0: i32) -> (i32, i32) {
    %c0_i32 = arith.constant 0 : i32
    %c0_i32_0 = arith.constant 0 : i32
    %c0_i32_1 = arith.constant 0 : i32
    return %c0_i32, %c0_i32_0 : i32, i32
  }
  func.func @transform_3(%arg0: i32) -> (i32, i32) {
    %c0_i32 = arith.constant 0 : i32
    %c0_i32_0 = arith.constant 0 : i32
    return %arg0, %c0_i32 : i32, i32
  }
}

</mosaic_0001>

<llo_original>
// kernel: tpu_custom_call.1
$region0: #{tpu_custom_call.1}
  #allocation0 [shape = 'u32[]', space=smem, size = 0x4, offset = 0x4, fixed_abs, tag = 'smem constant byte address 0x4 - core index']
  #allocation1 [shape = 'u32[144,128]{1,0:T(1,128)}', space=vmem, size = 0x12000, scoped, tag = 'internal scratch']
  %s0 = inlined_call_operand.hbm [shape: f32[8,256], index: 0, kind: input, shape index: {}]
  %s1 = inlined_call_operand.hbm [shape: bf16[256,256], index: 1, kind: input, shape index: {}]
  %s2 = inlined_call_operand.vmem [shape: f32[1,256], index: 2, kind: input, shape index: {}]
  %s3 = inlined_call_operand.hbm [shape: f32[8,256], index: 3, kind: output, shape index: {}]
  %s4 = sld [smem:[#allocation0]]
  $region30: #{tpu_custom_call.1} parent=0
    _
  %s6 = ssub.s32 1, %s4
  %s7 = scalar_select 0, %s6, %s4
  $region1: #{tpu_custom_call.1} parent=0
    #allocation2 [shape = 'u8[8192]{0}', space=vmem, size = 0x2000, scoped, tag = 'input window, operand 0, single buffered']
    #allocation3 [shape = 's32[1]{0}', space=sflag, size = 0x4, scoped, tag = 'scoped memory for tpu_custom_call.1']
    #allocation4 [shape = 's32[1]{0}', space=sflag, size = 0x4, scoped, tag = 'scoped memory for tpu_custom_call.1']
    #allocation5 [shape = 'u8[131072]{0}', space=vmem, size = 0x20000, scoped, tag = 'input window, operand 1, single buffered']
    #allocation6 [shape = 's32[1]{0}', space=sflag, size = 0x4, scoped, tag = 'scoped memory for tpu_custom_call.1']
    #allocation7 [shape = 'u8[8192]{0}', space=vmem, size = 0x2000, scoped, tag = 'output window, operand 0, single buffered']
    %8 = vsyncpa [#allocation3], 0
    %9 = vsyncpa [#allocation6], 0
    %10 = vsyncpa [#allocation4], 0
    // Predicated region
    $region2: #{tpu_custom_call.1} parent=1 // pred_check
      _
    $region3: #{tpu_custom_call.1} parent=1 // pred_check_branch
      %12 = sbr.rel (0) target = $region5
    $region4: #{tpu_custom_call.1} parent=1 // pred_region
      %s14 = ssub.s32 256, 256
      %15 = vsyncadd [#allocation3], %s14
      %s17 = sshll.u32 [#allocation2], 4
      %s18 = int_to_ptr.vmem [resolvable:$true] %s17
      %20 = dma.hbm_to_vmem [thread:$0]  %s0, 256, %s18, [#allocation3]
    $region5: #{tpu_custom_call.1} parent=1 // pred_fallthru
      _
    // Predicated region
    $region6: #{tpu_custom_call.1} parent=1 // pred_check
      _
    $region7: #{tpu_custom_call.1} parent=1 // pred_check_branch
      %22 = sbr.rel (0) target = $region9
    $region8: #{tpu_custom_call.1} parent=1 // pred_region
      %s24 = ssub.s32 4096, 4096
      %25 = vsyncadd [#allocation6], %s24
      %s26 = sshll.u32 [#allocation5], 4
      %s27 = int_to_ptr.vmem [resolvable:$true] %s26
      %32 = dma.hbm_to_vmem [thread:$0]  %s1, 4096, %s27, [#allocation6], 128, 128, 8
    $region9: #{tpu_custom_call.1} parent=1 // pred_fallthru
      _
    // Predicated region
    $region10: #{tpu_custom_call.1} parent=1 // pred_check
      _
    $region11: #{tpu_custom_call.1} parent=1 // pred_check_branch
      %34 = sbr.rel (0) target = $region13
    $region12: #{tpu_custom_call.1} parent=1 // pred_region
      _
    $region13: #{tpu_custom_call.1} parent=1 // pred_fallthru
      _
    // Predicated region
    $region14: #{tpu_custom_call.1} parent=1 // pred_check
      _
    $region15: #{tpu_custom_call.1} parent=1 // pred_check_branch
      %36 = sbr.rel (0) target = $region17
    $region16: #{tpu_custom_call.1} parent=1 // pred_region
      %37 = dma.done [#allocation3], 256
    $region17: #{tpu_custom_call.1} parent=1 // pred_fallthru
      _
    // Predicated region
    $region18: #{tpu_custom_call.1} parent=1 // pred_check
      _
    $region19: #{tpu_custom_call.1} parent=1 // pred_check_branch
      %39 = sbr.rel (0) target = $region21
    $region20: #{tpu_custom_call.1} parent=1 // pred_region
      %40 = dma.done [#allocation6], 4096
    $region21: #{tpu_custom_call.1} parent=1 // pred_fallthru
      _
    %v41 = vld [vmem:[#allocation2] sm:$0xff]
    %v42 = vld [vmem:[#allocation2 + $0x8] sm:$0xff]
    %v43 = vpack.c.bf16 %v41, %v41
    %v44 = vpack.c.bf16 %v42, %v42
    %v45 = vld [vmem:[#allocation5] sm:$0xff]
    %v46 = vld [vmem:[#allocation5 + $0x8] sm:$0xff]
    %v47 = vld [vmem:[#allocation5 + $0x10] sm:$0xff]
    %v48 = vld [vmem:[#allocation5 + $0x18] sm:$0xff]
    %v49 = vld [vmem:[#allocation5 + $0x20] sm:$0xff]
    %v50 = vld [vmem:[#allocation5 + $0x28] sm:$0xff]
    %v51 = vld [vmem:[#allocation5 + $0x30] sm:$0xff]
    %v52 = vld [vmem:[#allocation5 + $0x38] sm:$0xff]
    %v53 = vld [vmem:[#allocation5 + $0x40] sm:$0xff]
    %v54 = vld [vmem:[#allocation5 + $0x48] sm:$0xff]
    %v55 = vld [vmem:[#allocation5 + $0x50] sm:$0xff]
    %v56 = vld [vmem:[#allocation5 + $0x58] sm:$0xff]
    %v57 = vld [vmem:[#allocation5 + $0x60] sm:$0xff]
    %v58 = vld [vmem:[#allocation5 + $0x68] sm:$0xff]
    %v59 = vld [vmem:[#allocation5 + $0x70] sm:$0xff]
    %v60 = vld [vmem:[#allocation5 + $0x78] sm:$0xff]
    %v61 = vld [vmem:[#allocation5 + $0x80] sm:$0xff]
    %v62 = vld [vmem:[#allocation5 + $0x88] sm:$0xff]
    %v63 = vld [vmem:[#allocation5 + $0x90] sm:$0xff]
    %v64 = vld [vmem:[#allocation5 + $0x98] sm:$0xff]
    %v65 = vld [vmem:[#allocation5 + $0xa0] sm:$0xff]
    %v66 = vld [vmem:[#allocation5 + $0xa8] sm:$0xff]
    %v67 = vld [vmem:[#allocation5 + $0xb0] sm:$0xff]
    %v68 = vld [vmem:[#allocation5 + $0xb8] sm:$0xff]
    %v69 = vld [vmem:[#allocation5 + $0xc0] sm:$0xff]
    %v70 = vld [vmem:[#allocation5 + $0xc8] sm:$0xff]
    %v71 = vld [vmem:[#allocation5 + $0xd0] sm:$0xff]
    %v72 = vld [vmem:[#allocation5 + $0xd8] sm:$0xff]
    %v73 = vld [vmem:[#allocation5 + $0xe0] sm:$0xff]
    %v74 = vld [vmem:[#allocation5 + $0xe8] sm:$0xff]
    %v75 = vld [vmem:[#allocation5 + $0xf0] sm:$0xff]
    %v76 = vld [vmem:[#allocation5 + $0xf8] sm:$0xff]
    %v77 = vld [vmem:[%s2] sm:$0x3]
    %v79 = vlaneseq
    %v80 = vshrl.u32 %v79, 7
    %v81 = vsub.s32 0, %v80
    %v82 = vrot.slane %v77, %v81
    %v83 = vlaneseq
    %v84 = vshrl.u32 %v83, 7
    %v85 = vsub.s32 1, %v84
    %v86 = vrot.slane %v77, %v85
    %v121 = vunpack.c.l.b16 %v45
    %v122 = vunpack.c.h.b16 %v45
    %v123 = vunpack.c.l.b16 %v46
    %v124 = vunpack.c.h.b16 %v46
    %v125 = vunpack.c.l.b16 %v47
    %v126 = vunpack.c.h.b16 %v47
    %v127 = vunpack.c.l.b16 %v48
    %v128 = vunpack.c.h.b16 %v48
    %v129 = vunpack.c.l.b16 %v49
    %v130 = vunpack.c.h.b16 %v49
    %v131 = vunpack.c.l.b16 %v50
    %v132 = vunpack.c.h.b16 %v50
    %v133 = vunpack.c.l.b16 %v51
    %v134 = vunpack.c.h.b16 %v51
    %v135 = vunpack.c.l.b16 %v52
    %v136 = vunpack.c.h.b16 %v52
    %v137 = vunpack.c.l.b16 %v53
    %v138 = vunpack.c.h.b16 %v53
    %v139 = vunpack.c.l.b16 %v54
    %v140 = vunpack.c.h.b16 %v54
    %v141 = vunpack.c.l.b16 %v55
    %v142 = vunpack.c.h.b16 %v55
    %v143 = vunpack.c.l.b16 %v56
    %v144 = vunpack.c.h.b16 %v56
    %v145 = vunpack.c.l.b16 %v57
    %v146 = vunpack.c.h.b16 %v57
    %v147 = vunpack.c.l.b16 %v58
    %v148 = vunpack.c.h.b16 %v58
    %v149 = vunpack.c.l.b16 %v59
    %v150 = vunpack.c.h.b16 %v59
    %v151 = vunpack.c.l.b16 %v60
    %v152 = vunpack.c.h.b16 %v60
    %v153 = vunpack.c.l.b16 %v61
    %v154 = vunpack.c.h.b16 %v61
    %v155 = vunpack.c.l.b16 %v62
    %v156 = vunpack.c.h.b16 %v62
    %v157 = vunpack.c.l.b16 %v63
    %v158 = vunpack.c.h.b16 %v63
    %v159 = vunpack.c.l.b16 %v64
    %v160 = vunpack.c.h.b16 %v64
    %v161 = vunpack.c.l.b16 %v65
    %v162 = vunpack.c.h.b16 %v65
    %v163 = vunpack.c.l.b16 %v66
    %v164 = vunpack.c.h.b16 %v66
    %v165 = vunpack.c.l.b16 %v67
    %v166 = vunpack.c.h.b16 %v67
    %v167 = vunpack.c.l.b16 %v68
    %v168 = vunpack.c.h.b16 %v68
    %v169 = vunpack.c.l.b16 %v69
    %v170 = vunpack.c.h.b16 %v69
    %v171 = vunpack.c.l.b16 %v70
    %v172 = vunpack.c.h.b16 %v70
    %v173 = vunpack.c.l.b16 %v71
    %v174 = vunpack.c.h.b16 %v71
    %v175 = vunpack.c.l.b16 %v72
    %v176 = vunpack.c.h.b16 %v72
    %v177 = vunpack.c.l.b16 %v73
    %v178 = vunpack.c.h.b16 %v73
    %v179 = vunpack.c.l.b16 %v74
    %v180 = vunpack.c.h.b16 %v74
    %v181 = vunpack.c.l.b16 %v75
    %v182 = vunpack.c.h.b16 %v75
    %v183 = vunpack.c.l.b16 %v76
    %v184 = vunpack.c.h.b16 %v76
    %v185 = vpack.c.b16 %v123, %v121
    %v186 = vpack.c.b16 %v124, %v122
    %v187 = vpack.c.b16 %v127, %v125
    %v188 = vpack.c.b16 %v128, %v126
    %v189 = vpack.c.b16 %v131, %v129
    %v190 = vpack.c.b16 %v132, %v130
    %v191 = vpack.c.b16 %v135, %v133
    %v192 = vpack.c.b16 %v136, %v134
    %v193 = vpack.c.b16 %v139, %v137
    %v194 = vpack.c.b16 %v140, %v138
    %v195 = vpack.c.b16 %v143, %v141
    %v196 = vpack.c.b16 %v144, %v142
    %v197 = vpack.c.b16 %v147, %v145
    %v198 = vpack.c.b16 %v148, %v146
    %v199 = vpack.c.b16 %v151, %v149
    %v200 = vpack.c.b16 %v152, %v150
    %v201 = vpack.c.b16 %v155, %v153
    %v202 = vpack.c.b16 %v156, %v154
    %v203 = vpack.c.b16 %v159, %v157
    %v204 = vpack.c.b16 %v160, %v158
    %v205 = vpack.c.b16 %v163, %v161
    %v206 = vpack.c.b16 %v164, %v162
    %v207 = vpack.c.b16 %v167, %v165
    %v208 = vpack.c.b16 %v168, %v166
    %v209 = vpack.c.b16 %v171, %v169
    %v210 = vpack.c.b16 %v172, %v170
    %v211 = vpack.c.b16 %v175, %v173
    %v212 = vpack.c.b16 %v176, %v174
    %v213 = vpack.c.b16 %v179, %v177
    %v214 = vpack.c.b16 %v180, %v178
    %v215 = vpack.c.b16 %v183, %v181
    %v216 = vpack.c.b16 %v184, %v182
    %249 = vmatprep.subr.bf16.mxu0 %v186
    %250 = vmatpush1.bf16.msra.mxu0 %v185
    %251 = vmatprep.subr.bf16.mxu0 %v188
    %252 = vmatpush1.bf16.msra.mxu0 %v187
    %253 = vmatprep.subr.bf16.mxu0 %v190
    %254 = vmatpush1.bf16.msra.mxu0 %v189
    %255 = vmatprep.subr.bf16.mxu0 %v192
    %256 = vmatpush1.bf16.msra.mxu0 %v191
    %257 = vmatprep.subr.bf16.mxu0 %v194
    %258 = vmatpush1.bf16.msra.mxu0 %v193
    %259 = vmatprep.subr.bf16.mxu0 %v196
    %260 = vmatpush1.bf16.msra.mxu0 %v195
    %261 = vmatprep.subr.bf16.mxu0 %v198
    %262 = vmatpush1.bf16.msra.mxu0 %v197
    %263 = vmatprep.subr.bf16.mxu0 %v200
    %264 = vmatpush1.bf16.msra.mxu0 %v199
    %265 = vmatprep.subr.bf16.mxu0 %v202
    %266 = vmatpush1.bf16.msra.mxu0 %v201
    %267 = vmatprep.subr.bf16.mxu0 %v204
    %268 = vmatpush1.bf16.msra.mxu0 %v203
    %269 = vmatprep.subr.bf16.mxu0 %v206
    %270 = vmatpush1.bf16.msra.mxu0 %v205
    %271 = vmatprep.subr.bf16.mxu0 %v208
    %272 = vmatpush1.bf16.msra.mxu0 %v207
    %273 = vmatprep.subr.bf16.mxu0 %v210
    %274 = vmatpush1.bf16.msra.mxu0 %v209
    %275 = vmatprep.subr.bf16.mxu0 %v212
    %276 = vmatpush1.bf16.msra.mxu0 %v211
    %277 = vmatprep.subr.bf16.mxu0 %v214
    %278 = vmatpush1.bf16.msra.mxu0 %v213
    %279 = vmatprep.subr.bf16.mxu0 %v216
    %280 = vmatpush1.bf16.msra.mxu0 %v215
    %281 = vmatprep.mubr.bf16.mxu0 %v44
    %282 = vmatmul.mubr.bf16.gmra.mrb[0].mxu0 %v43
    %v283 = vpop.f32.mrb[0].mxu0
    %v284 = vadd.f32 %v82, %v283
    %v285 = vpop.f32.mrb[0].mxu0
    %v286 = vadd.f32 %v86, %v285
    %v287 = vpop.f32.mrb[0].mxu0
    %v288 = vpop.f32.mrb[0].mxu0
    %289 = vdwg.mxu0
    %290 = vst [vmem:[#allocation7] sm:$0xff] %v284
    %291 = vst [vmem:[#allocation7 + $0x8] sm:$0xff] %v286
    // Predicated region
    $region22: #{tpu_custom_call.1} parent=1 // pred_check
      _
    $region23: #{tpu_custom_call.1} parent=1 // pred_check_branch
      %293 = sbr.rel (0) target = $region25
    $region24: #{tpu_custom_call.1} parent=1 // pred_region
      %s295 = ssub.s32 256, 256
      %296 = vsyncadd [#allocation4], %s295
      %s298 = sshll.u32 [#allocation7], 4
      %s299 = int_to_ptr.vmem [resolvable:$true] %s298
      %301 = dma.vmem_to_hbm [thread:$0]  %s299, 256, %s3, [#allocation4]
    $region25: #{tpu_custom_call.1} parent=1 // pred_fallthru
      _
    // Predicated region
    $region26: #{tpu_custom_call.1} parent=1 // pred_check
      _
    $region27: #{tpu_custom_call.1} parent=1 // pred_check_branch
      %303 = sbr.rel (0) target = $region29
    $region28: #{tpu_custom_call.1} parent=1 // pred_region
      %304 = dma.done [#allocation4], 256
    $region29: #{tpu_custom_call.1} parent=1 // pred_fallthru
      _
    %305 = vsyncpa [#allocation3], 1
    %306 = vsyncpa [#allocation6], 1
    %307 = vsyncpa [#allocation4], 1

</llo_original>
